<compile_context>
chip_gen: v7x
topology: tpu7x:2x2x1
jax: 0.10.0
libtpu: 0.0.40
codegen_flags: <defaults>
</compile_context>

<pallas_src>
import functools

import jax
import jax.numpy as jnp
import numpy as np
from jax import lax
from jax.experimental import pallas as pl
from jax.experimental.pallas import tpu as pltpu

_LANE = 128
_SUBLANE = 8
_MAX_RESIDENT_ROWS = 64      # (64, 128) int32 keys = 8 vregs kept live
_ROW_CHUNK = 64              # streamed (64, 128) slab for large rows


def _monotone_key(x_f32):
    """int32 key with the same total order as the float32 values (no NaNs)."""
    bits = pltpu.bitcast(x_f32, jnp.int32)
    return jnp.where(bits < 0, bits ^ jnp.int32(0x7FFFFFFF), bits)


def _hnm_row_kernel(x_ref, out_ref, *, k: int, rows: int, row_chunk: int):
    # x_ref:  (rows, 128) f32 in VMEM — one batch row, padded with -inf.
    # out_ref: (1, 128)   f32 in VMEM — sum of this row's k largest values
    #          broadcast across the lane (lane-dense store).
    n_chunks = rows // row_chunk
    kk = jnp.int32(k)
    neg_inf = jnp.float32(-jnp.inf)

    if n_chunks == 1:
        # Small row: keep only the int32 keys resident across the search.
        keys = _monotone_key(x_ref[...])

        def count_ge(mid):
            return jnp.sum((keys >= mid).astype(jnp.int32))

        def final_stats(t_key):
            x = x_ref[...]
            gt = keys > t_key
            s_gt = jnp.sum(jnp.where(gt, x, 0.0))
            n_gt = jnp.sum(gt.astype(jnp.int32))
            t_val = jnp.max(jnp.where(gt, neg_inf, x))   # == k-th largest value
            return s_gt, n_gt, t_val
    else:
        # Large row: stream (row_chunk, 128) slabs from VMEM (ref views are free).
        def count_ge(mid):
            def body(c, acc):
                start = pl.multiple_of(c * row_chunk, row_chunk)
                ks = _monotone_key(x_ref[pl.ds(start, row_chunk), :])
                return acc + jnp.sum((ks >= mid).astype(jnp.int32))
            return lax.fori_loop(0, n_chunks, body, jnp.int32(0))

        def final_stats(t_key):
            def body(c, carry):
                s_gt, n_gt, t_val = carry
                start = pl.multiple_of(c * row_chunk, row_chunk)
                xs = x_ref[pl.ds(start, row_chunk), :]
                ks = _monotone_key(xs)
                gt = ks > t_key
                s_gt = s_gt + jnp.sum(jnp.where(gt, xs, 0.0))
                n_gt = n_gt + jnp.sum(gt.astype(jnp.int32))
                t_val = jnp.maximum(t_val, jnp.max(jnp.where(gt, neg_inf, xs)))
                return s_gt, n_gt, t_val
            return lax.fori_loop(0, n_chunks, body,
                                 (jnp.float32(0.0), jnp.int32(0), neg_inf))

    # Binary search in monotone-key space for the k-th largest key.
    # Invariant: count(>= lo) >= k, count(>= hi) < k.  32 iterations are exact.
    def bs_body(_, carry):
        lo, hi = carry
        mid = (lo & hi) + ((lo ^ hi) >> 1)     # overflow-safe floor((lo + hi) / 2)
        ok = count_ge(mid) >= kk
        return jnp.where(ok, mid, lo), jnp.where(ok, hi, mid)

    lo0 = jnp.int32(-2147483648)
    hi0 = jnp.int32(2147483647)
    t_key, _ = lax.fori_loop(0, 32, bs_body, (lo0, hi0))

    # Exact top-k sum with tie handling at the threshold:
    #   sum(top-k) = sum(x > t) + t * (k - #{x > t})
    s_gt, n_gt, t_val = final_stats(t_key)
    topk_sum = s_gt + t_val * (kk - n_gt).astype(jnp.float32)
    out_ref[...] = jnp.broadcast_to(topk_sum, (1, _LANE)).astype(jnp.float32)


def hard_negative_mining(loss: jax.Array, _=None, *, perc: float = 0.25):
    """JAX/Pallas equivalent of HardNegativeMining.forward(loss, _)."""
    b = loss.shape[0]
    x = loss.reshape(b, -1).astype(jnp.float32)
    p0 = x.shape[1]
    k = int(perc * p0)
    assert k >= 1, "perc * numel-per-row must be >= 1"

    # Pad the per-row length so each row forms a fully packed (rows, 128) slab
    # whose row count divides the streaming chunk size.
    if p0 <= _MAX_RESIDENT_ROWS * _LANE:                 # <= 8192 elements/row
        tile_elems = _SUBLANE * _LANE                    # 1024
    else:
        tile_elems = _ROW_CHUNK * _LANE                  # 8192
    p_pad = ((p0 + tile_elems - 1) // tile_elems) * tile_elems
    rows = p_pad // _LANE
    row_chunk = rows if rows <= _MAX_RESIDENT_ROWS else _ROW_CHUNK

    if p_pad > p0:
        pad = jnp.full((b, p_pad - p0), -jnp.inf, dtype=jnp.float32)
        x = jnp.concatenate([x, pad], axis=1)
    x3 = x.reshape(b, rows, _LANE)

    # Derived VMEM budget: double-buffered input row blocks + slack, v7x-safe cap.
    # TODO(synk): rows > ~6M elements would need an extra grid axis over row chunks.
    block_bytes = rows * _LANE * 4
    vmem_limit = int(min(max(4 * block_bytes, 16 << 20), 48 << 20))

    kernel = functools.partial(_hnm_row_kernel, k=k, rows=rows,
                               row_chunk=row_chunk)

    row_sums = pl.pallas_call(
        kernel,
        out_shape=jax.ShapeDtypeStruct((b, 1, _LANE), jnp.float32),
        grid=(b,),
        in_specs=[pl.BlockSpec((None, rows, _LANE), lambda i: (i, 0, 0))],
        out_specs=pl.BlockSpec((None, 1, _LANE), lambda i: (i, 0, 0)),
        compiler_params=pltpu.CompilerParams(
            dimension_semantics=("parallel",),
            vmem_limit_bytes=vmem_limit),
    )(x3)

    # Trivial final reduction over B per-row sums (done in the wrapper).
    return jnp.sum(row_sums[:, 0, 0]) / jnp.float32(b * k)


def _reference(loss: jax.Array, perc: float = 0.25):
    b = loss.shape[0]
    x = loss.reshape(b, -1).astype(jnp.float32)
    k = int(perc * x.shape[1])
    topk_vals, _ = lax.top_k(x, k)
    return jnp.mean(topk_vals)


if __name__ == "__main__":
    key = jax.random.PRNGKey(0)

    # Primary case: NCHW per-pixel loss map, row length already lane-aligned.
    loss = jax.random.normal(key, (2, 4, 16, 16), dtype=jnp.float32) ** 2
    out = jax.block_until_ready(hard_negative_mining(loss, None, perc=0.25))
    ref = jax.block_until_ready(_reference(loss, perc=0.25))
    np.testing.assert_allclose(np.asarray(out), np.asarray(ref),
                               rtol=1e-5, atol=1e-5)

    # Non-aligned row length (exercises the -inf padding path).
    k2 = jax.random.PRNGKey(1)
    loss2 = jax.random.normal(k2, (2, 3, 10, 10), dtype=jnp.float32) ** 2
    out2 = jax.block_until_ready(hard_negative_mining(loss2, None, perc=0.25))
    ref2 = jax.block_until_ready(_reference(loss2, perc=0.25))
    np.testing.assert_allclose(np.asarray(out2), np.asarray(ref2),
                               rtol=1e-4, atol=1e-5)

    # Larger row (exercises the streamed multi-chunk path).
    k3 = jax.random.PRNGKey(2)
    loss3 = jax.random.normal(k3, (2, 4, 72, 72), dtype=jnp.float32) ** 2
    out3 = jax.block_until_ready(hard_negative_mining(loss3, None, perc=0.25))
    ref3 = jax.block_until_ready(_reference(loss3, perc=0.25))
    np.testing.assert_allclose(np.asarray(out3), np.asarray(ref3),
                               rtol=1e-4, atol=1e-5)

    print("KERNEL_OK")
</pallas_src>

<mosaic_0001>
module attributes {stable_mosaic.version = 11 : i64} {
  func.func @_hnm_row_kernel(%arg0: i32, %arg1: memref<1x8x128xf32, #tpu.memory_space<vmem>>, %arg2: memref<1x1x128xf32, #tpu.memory_space<vmem>>) attributes {dimension_semantics = [#tpu.dimension_semantics<parallel>], iteration_bounds = array<i64: 2>, scalar_prefetch = 0 : i64, scratch_operands = 0 : i64, tpu.core_type = #tpu.core_type<tc>, window_params = [{transform_indices = @transform_0, window_bounds = array<i64: 1, 8, 128>}, {transform_indices = @transform_1, window_bounds = array<i64: 1, 1, 128>}]} {
    %c0 = arith.constant 0 : index
    %c0_0 = arith.constant 0 : index
    %c0_1 = arith.constant 0 : index
    %0 = vector.load %arg1[%c0, %c0_0, %c0_1] : memref<1x8x128xf32, #tpu.memory_space<vmem>>, vector<1x8x128xf32>
    %1 = vector.shape_cast %0 : vector<1x8x128xf32> to vector<8x128xf32>
    %2 = tpu.bitcast %1 : vector<8x128xf32> -> vector<8x128xi32>
    %c0_i32 = arith.constant 0 : i32
    %3 = vector.broadcast %c0_i32 : i32 to vector<8x128xi32>
    %4 = arith.cmpi slt, %2, %3 : vector<8x128xi32>
    %c2147483647_i32 = arith.constant 2147483647 : i32
    %5 = vector.broadcast %c2147483647_i32 : i32 to vector<8x128xi32>
    %6 = arith.xori %2, %5 : vector<8x128xi32>
    %7 = arith.select %4, %6, %2 : vector<8x128xi1>, vector<8x128xi32>
    %c256_i32 = arith.constant 256 : i32
    %c-2147483648_i32 = arith.constant -2147483648 : i32
    %c2147483647_i32_2 = arith.constant 2147483647 : i32
    %c0_i32_3 = arith.constant 0 : i32
    %c32_i32 = arith.constant 32 : i32
    %8 = arith.addi %c0_i32_3, %c32_i32 : i32
    %c1_i32 = arith.constant 1 : i32
    %9:2 = scf.for %arg3 = %c0_i32_3 to %8 step %c1_i32 iter_args(%arg4 = %c-2147483648_i32, %arg5 = %c2147483647_i32_2) -> (i32, i32)  : i32 {
      %39 = arith.andi %arg4, %arg5 : i32
      %40 = arith.xori %arg4, %arg5 : i32
      %c1_i32_15 = arith.constant 1 : i32
      %41 = arith.shrsi %40, %c1_i32_15 : i32
      %42 = arith.addi %39, %41 : i32
      %43 = vector.broadcast %42 : i32 to vector<8x128xi32>
      %44 = arith.cmpi sge, %7, %43 : vector<8x128xi32>
      %45 = arith.extui %44 : vector<8x128xi1> to vector<8x128xi32>
      %46 = vector.shape_cast %45 : vector<8x128xi32> to vector<1x8x128xi32>
      %cst_16 = arith.constant dense<0> : vector<1xi32>
      %47 = vector.multi_reduction <add>, %46, %cst_16 [1, 2] : vector<1x8x128xi32> to vector<1xi32>
      %48 = vector.shape_cast %47 : vector<1xi32> to vector<1x1x1xi32>
      %49 = vector.extract %48[0, 0, 0] : i32 from vector<1x1x1xi32>
      %50 = arith.cmpi sge, %49, %c256_i32 : i32
      %51 = arith.select %50, %42, %arg4 : i32
      %52 = arith.select %50, %arg5, %42 : i32
      scf.yield %51, %52 : i32, i32
    }
    %c0_4 = arith.constant 0 : index
    %c0_5 = arith.constant 0 : index
    %c0_6 = arith.constant 0 : index
    %10 = vector.load %arg1[%c0_4, %c0_5, %c0_6] : memref<1x8x128xf32, #tpu.memory_space<vmem>>, vector<1x8x128xf32>
    %11 = vector.shape_cast %10 : vector<1x8x128xf32> to vector<8x128xf32>
    %12 = vector.broadcast %9#0 : i32 to vector<8x128xi32>
    %13 = arith.cmpi sgt, %7, %12 : vector<8x128xi32>
    %cst = arith.constant 0.000000e+00 : f32
    %14 = vector.broadcast %cst : f32 to vector<8x128xf32>
    %15 = arith.select %13, %11, %14 : vector<8x128xi1>, vector<8x128xf32>
    %16 = vector.shape_cast %15 : vector<8x128xf32> to vector<1x8x128xf32>
    %cst_7 = arith.constant dense<0.000000e+00> : vector<1xf32>
    %17 = vector.multi_reduction <add>, %16, %cst_7 [1, 2] : vector<1x8x128xf32> to vector<1xf32>
    %18 = vector.shape_cast %17 : vector<1xf32> to vector<1x1x1xf32>
    %19 = vector.extract %18[0, 0, 0] : f32 from vector<1x1x1xf32>
    %20 = arith.extui %13 : vector<8x128xi1> to vector<8x128xi32>
    %21 = vector.shape_cast %20 : vector<8x128xi32> to vector<1x8x128xi32>
    %cst_8 = arith.constant dense<0> : vector<1xi32>
    %22 = vector.multi_reduction <add>, %21, %cst_8 [1, 2] : vector<1x8x128xi32> to vector<1xi32>
    %23 = vector.shape_cast %22 : vector<1xi32> to vector<1x1x1xi32>
    %24 = vector.extract %23[0, 0, 0] : i32 from vector<1x1x1xi32>
    %cst_9 = arith.constant 0xFF800000 : f32
    %25 = vector.broadcast %cst_9 : f32 to vector<8x128xf32>
    %26 = arith.select %13, %25, %11 : vector<8x128xi1>, vector<8x128xf32>
    %27 = vector.shape_cast %26 : vector<8x128xf32> to vector<1x8x128xf32>
    %cst_10 = arith.constant dense<0xFF800000> : vector<1xf32>
    %28 = vector.multi_reduction <maximumf>, %27, %cst_10 [1, 2] : vector<1x8x128xf32> to vector<1xf32>
    %29 = vector.shape_cast %28 : vector<1xf32> to vector<1x1x1xf32>
    %30 = vector.extract %29[0, 0, 0] : f32 from vector<1x1x1xf32>
    %c256_i32_11 = arith.constant 256 : i32
    %31 = arith.subi %c256_i32_11, %24 : i32
    %32 = arith.sitofp %31 : i32 to f32
    %33 = arith.mulf %30, %32 : f32
    %34 = arith.addf %19, %33 : f32
    %35 = vector.broadcast %34 : f32 to vector<1x128xf32>
    %c0_12 = arith.constant 0 : index
    %c0_13 = arith.constant 0 : index
    %c0_14 = arith.constant 0 : index
    %36 = vector.load %arg2[%c0_12, %c0_13, %c0_14] : memref<1x1x128xf32, #tpu.memory_space<vmem>>, vector<1x1x128xf32>
    %37 = vector.shape_cast %36 : vector<1x1x128xf32> to vector<1x128xf32>
    %38 = vector.shape_cast %35 : vector<1x128xf32> to vector<1x1x128xf32>
    tpu.vector_store %arg2[%c0_12, %c0_13, %c0_14], %38 {strides = array<i32>} : memref<1x1x128xf32, #tpu.memory_space<vmem>>, vector<1x1x128xf32>,
    return
  }
  func.func @transform_0(%arg0: i32) -> (i32, i32, i32) {
    %c0_i32 = arith.constant 0 : i32
    %c0_i32_0 = arith.constant 0 : i32
    %c0_i32_1 = arith.constant 0 : i32
    return %arg0, %c0_i32, %c0_i32_0 : i32, i32, i32
  }
  func.func @transform_1(%arg0: i32) -> (i32, i32, i32) {
    %c0_i32 = arith.constant 0 : i32
    %c0_i32_0 = arith.constant 0 : i32
    %c0_i32_1 = arith.constant 0 : i32
    return %arg0, %c0_i32, %c0_i32_0 : i32, i32, i32
  }
}

</mosaic_0001>

<llo_original>
// kernel: tpu_custom_call.1
$region0: #{tpu_custom_call.1}
  #allocation0 [shape = 'u32[]', space=smem, size = 0x4, offset = 0x4, fixed_abs, tag = 'smem constant byte address 0x4 - core index']
  #allocation1 [shape = 'u32[144,128]{1,0:T(1,128)}', space=vmem, size = 0x12000, scoped, tag = 'internal scratch']
  %s0 = inlined_call_operand.hbm [shape: f32[2,8,128], index: 0, kind: input, shape index: {}]
  %s1 = inlined_call_operand.hbm [shape: f32[2,1,128], index: 1, kind: output, shape index: {}]
  %s2 = sld [smem:[#allocation0]]
  $region48: #{tpu_custom_call.1} parent=0
    _
  %s4 = ssub.s32 1, %s2
  %s5 = scalar_select 0, %s4, %s2
  $region1: #{tpu_custom_call.1} parent=0
    #allocation2 [shape = 'u8[8192]{0}', space=vmem, size = 0x2000, scoped, tag = 'input window, operand 0']
    #allocation3 [shape = 's32[2]{0}', space=sflag, size = 0x8, scoped, tag = 'scoped memory for tpu_custom_call.1']
    #allocation4 [shape = 's32[2]{0}', space=sflag, size = 0x8, scoped, tag = 'scoped memory for tpu_custom_call.1']
    #allocation5 [shape = 'u8[1024]{0}', space=vmem, size = 0x400, scoped, tag = 'output window, operand 0']
    %6 = vsyncpa [#allocation3], 0
    %s7 = scalar_lea.sflag [#allocation3], 1
    %8 = vsyncpa %s7, 0
    %9 = vsyncpa [#allocation4], 0
    %s10 = scalar_lea.sflag [#allocation4], 1
    %11 = vsyncpa %s10, 0
    loop: start=0, step=1, limit=4
    $region2: #{tpu_custom_call.1} parent=1 // loop_pre_header
      _
    $region3: #{tpu_custom_call.1} parent=1 // loop_header
      %s13 = sphi 0, %s17
      %p14 = scmp.ge.s32.totalorder %s13, 4
      %s23 = sphi 0, %s25
      %s26 = sphi 0, %s23
      %s27 = sphi 0, %s26
      %s43 = sphi 0, %s27
      %s49 = sphi 0, %s51
      %s52 = sphi 0, %s49
      %s53 = sphi 0, %s52
      %s69 = sphi 0, %s53
    $region4: #{tpu_custom_call.1} parent=1 // loop_header_branch
      %16 = sbr.rel (%p14) target = $region8
    $region5: #{tpu_custom_call.1} parent=1 // loop_body
      %s18 = ssub.s32 %s13, 1
      %s19 = ssub.s32 %s13, 2
      %s20 = sadd.s32 %s13, 1
      %s21 = ssub.s32 %s13, %s20
      %p22 = scmp.eq.s32.totalorder %s21, 0
      %s24 = sadd.s32 %s23, 1
      %s25 = scalar_select %p22, %s23, %s24
      %p28 = pneg %p22
      %p29 = scmp.eq.s32.totalorder %s13, 1
      %p30 = por %p28, %p29
      %p31 = scmp.ne.s32.totalorder %s23, %s26
      %p32 = scmp.eq.s32.totalorder %s13, 0
      %p33 = por %p31, %p32
      %p34 = scmp.ne.s32.totalorder %s23, %s26
      %p35 = scmp.eq.s32.totalorder %s18, 1
      %p36 = por %p34, %p35
      %p37 = scmp.ne.s32.totalorder %s26, %s27
      %p38 = scmp.eq.s32.totalorder %s18, 0
      %p39 = por %p37, %p38
      %p40 = scmp.ne.s32.totalorder %s26, %s27
      %p41 = scmp.eq.s32.totalorder %s19, 1
      %p42 = por %p40, %p41
      %p44 = scmp.ne.s32.totalorder %s27, %s43
      %p45 = scmp.eq.s32.totalorder %s19, 0
      %p46 = por %p44, %p45
      %s47 = ssub.s32 %s13, %s20
      %p48 = scmp.eq.s32.totalorder %s47, 0
      %s50 = sadd.s32 %s49, 1
      %s51 = scalar_select %p48, %s49, %s50
      %p54 = pneg %p48
      %p55 = scmp.eq.s32.totalorder %s13, 1
      %p56 = por %p54, %p55
      %p57 = scmp.ne.s32.totalorder %s49, %s52
      %p58 = scmp.eq.s32.totalorder %s13, 0
      %p59 = por %p57, %p58
      %p60 = scmp.ne.s32.totalorder %s49, %s52
      %p61 = scmp.eq.s32.totalorder %s18, 1
      %p62 = por %p60, %p61
      %p63 = scmp.ne.s32.totalorder %s52, %s53
      %p64 = scmp.eq.s32.totalorder %s18, 0
      %p65 = por %p63, %p64
      %p66 = scmp.ne.s32.totalorder %s52, %s53
      %p67 = scmp.eq.s32.totalorder %s19, 1
      %p68 = por %p66, %p67
      %p70 = scmp.ne.s32.totalorder %s53, %s69
      %p71 = scmp.eq.s32.totalorder %s19, 0
      %p72 = por %p70, %p71
      %p73 = scmp.le.s32.totalorder 1, %s13
      %p74 = scmp.lt.s32.totalorder %s13, 3
      %p75 = pnand %p73, %p74
      %p76 = pneg %p75
      // Predicated region
      $region9: #{tpu_custom_call.1} parent=5 // pred_check
        _
      $region10: #{tpu_custom_call.1} parent=5 // pred_check_branch
        %78 = sbr.rel (%p75) target = $region12
      $region11: #{tpu_custom_call.1} parent=5 // pred_region
        %s79 = ssub.s32 %s13, 1
      $region12: #{tpu_custom_call.1} parent=5 // pred_fallthru
        _
      %p80 = scmp.lt.s32.totalorder %s13, 2
      // Predicated region
      $region13: #{tpu_custom_call.1} parent=5 // pred_check
        %p81 = pneg %p80
      $region14: #{tpu_custom_call.1} parent=5 // pred_check_branch
        %83 = sbr.rel (%p81) target = $region16
      $region15: #{tpu_custom_call.1} parent=5 // pred_region
        // Predicated region
        $region17: #{tpu_custom_call.1} parent=15 // pred_check
          %p84 = pneg %p33
        $region18: #{tpu_custom_call.1} parent=15 // pred_check_branch
          %86 = sbr.rel (%p84) target = $region20
        $region19: #{tpu_custom_call.1} parent=15 // pred_region
          %s87 = sand.u32 %s23, 1
          %s88 = scalar_lea.sflag [#allocation3], %s87
          %s89 = sand.u32 %s23, 1
          %s90 = smul.addr %s89, 8
          %s91 = scalar_lea.vmem [#allocation2], %s90
          %s93 = ssub.s32 128, 128
          %94 = vsyncadd %s88, %s93
          %s95 = smul.addr %s13, 128
          %s96 = scalar_lea.hbm %s0, %s95
          %s98 = sshll.u32 %s91, 4
          %s99 = int_to_ptr.vmem [resolvable:$true] %s98
          %101 = dma.hbm_to_vmem [thread:$0]  %s96, 128, %s99, %s88
        $region20: #{tpu_custom_call.1} parent=15 // pred_fallthru
          _
      $region16: #{tpu_custom_call.1} parent=5 // pred_fallthru
        _
      %p102 = scmp.le.s32.totalorder 1, %s13
      %p103 = scmp.lt.s32.totalorder %s13, 3
      %p104 = pnand %p102, %p103
      %p105 = pneg %p104
      // Predicated region
      $region21: #{tpu_custom_call.1} parent=5 // pred_check
        _
      $region22: #{tpu_custom_call.1} parent=5 // pred_check_branch
        %107 = sbr.rel (%p104) target = $region24
      $region23: #{tpu_custom_call.1} parent=5 // pred_region
        %s108 = ssub.s32 %s13, 1
        %s109 = sand.u32 %s26, 1
        %s110 = scalar_lea.sflag [#allocation3], %s109
        %s111 = sand.u32 %s26, 1
        %s112 = smul.addr %s111, 8
        %s113 = scalar_lea.vmem [#allocation2], %s112
        // Predicated region
        $region25: #{tpu_custom_call.1} parent=23 // pred_check
          %p114 = pneg %p39
        $region26: #{tpu_custom_call.1} parent=23 // pred_check_branch
          %116 = sbr.rel (%p114) target = $region28
        $region27: #{tpu_custom_call.1} parent=23 // pred_region
          %117 = dma.done %s110, 128
        $region28: #{tpu_custom_call.1} parent=23 // pred_fallthru
          _
        %s118 = sand.u32 %s26, 1
        %s119 = scalar_lea.sflag [#allocation3], %s118
        %s120 = sand.u32 %s26, 1
        %s121 = smul.addr %s120, 8
        %s122 = scalar_lea.vmem [#allocation2], %s121
        %p123 = pneg %p39
        %p124 = pneg %p36
        %p125 = pneg %p65
        %p126 = pneg %p62
        %s127 = sand.u32 %s52, 1
        %s128 = scalar_lea.sflag [#allocation4], %s127
        %s129 = sand.u32 %s52, 1
        %s130 = scalar_lea.vmem [#allocation5], %s129
        %v131 = vld [vmem:[%s113] sm:$0xff]
        %vm133 = vcmp.lt.s32.totalorder %v131, 0
        %v134 = vxor.u32 %v131, 2147483647
        %v135 = vsel %vm133, %v134, %v131
        loop: start=0, step=1, limit=32
        $region29: #{tpu_custom_call.1} parent=23 // loop_pre_header
          _
        $region30: #{tpu_custom_call.1} parent=23 // loop_header
          %s137 = sphi 0, %s141
          %p138 = scmp.ge.s32.totalorder %s137, 32
          %s142 = sphi 2147483648, %s171
          %s143 = sphi 2147483647, %s172
        $region31: #{tpu_custom_call.1} parent=23 // loop_header_branch
          %140 = sbr.rel (%p138) target = $region35
        $region32: #{tpu_custom_call.1} parent=23 // loop_body
          %s144 = sand.u32 %s142, %s143
          %s145 = sxor.u32 %s142, %s143
          %s146 = sshra.s32 %s145, 1
          %s147 = sadd.s32 %s144, %s146
          %v148 = vstv %s147
          %vm149 = vcmp.ge.s32.totalorder %v135, %v148
          %v150 = vsel %vm149, 1, 0
          %v151 = vand.u32 %v150, 65535
          %v152 = vshrl.u32 %v150, 16
          %v153 = vcvt.s32.f32 %v151
          %v154 = vcvt.s32.f32 %v152
          %155 = vadd.xlane.f32.xlu0 %v153
          %v156 = vpop.xlane.xlu0 %155
          %157 = vadd.xlane.f32.xlu0 %v154
          %v158 = vpop.xlane.xlu0 %157
          %v159 = vcvt.f32.s32 %v156
          %v160 = vcvt.f32.s32 %v158
          %v161 = vshll.u32 %v160, 16
          %v162 = vadd.s32 %v161, %v159
          %v163 = vrot.slane %v162, 4
          %v164 = vadd.s32 %v162, %v163
          %v165 = vrot.slane %v164, 2
          %v166 = vadd.s32 %v164, %v165
          %v167 = vrot.slane %v166, 1
          %v168 = vadd.s32 %v166, %v167
          %s169 = vtos %v168
          %p170 = scmp.ge.s32.totalorder %s169, 256
          %s171 = scalar_select %p170, %s147, %s142
          %s172 = scalar_select %p170, %s143, %s147
        $region33: #{tpu_custom_call.1} parent=23 // loop_footer
          %s141 = sadd.s32 1, %s137
        $region34: #{tpu_custom_call.1} parent=23 // loop_footer_branch
          %136 = sbr.rel target = $region30
        $region35: #{tpu_custom_call.1} parent=23 // loop_exit
          _
        %v173 = vstv %s142
        %vm174 = vcmp.gt.s32.totalorder %v135, %v173
        %v175 = vsel %vm174, %v131, 0.0
        %176 = vadd.xlane.f32.xlu0 %v175
        %v177 = vpop.xlane.xlu0 %176
        %v178 = vrot.slane %v177, 4
        %v179 = vadd.f32 %v177, %v178
        %v180 = vrot.slane %v179, 2
        %v181 = vadd.f32 %v179, %v180
        %v182 = vrot.slane %v181, 1
        %v183 = vadd.f32 %v181, %v182
        %s184 = vtos %v183
        %v185 = vsel %vm174, 1, 0
        %v186 = vand.u32 %v185, 65535
        %v187 = vshrl.u32 %v185, 16
        %v188 = vcvt.s32.f32 %v186
        %v189 = vcvt.s32.f32 %v187
        %190 = vadd.xlane.f32.xlu0 %v188
        %v191 = vpop.xlane.xlu0 %190
        %192 = vadd.xlane.f32.xlu0 %v189
        %v193 = vpop.xlane.xlu0 %192
        %v194 = vcvt.f32.s32 %v191
        %v195 = vcvt.f32.s32 %v193
        %v196 = vshll.u32 %v195, 16
        %v197 = vadd.s32 %v196, %v194
        %v198 = vrot.slane %v197, 4
        %v199 = vadd.s32 %v197, %v198
        %v200 = vrot.slane %v199, 2
        %v201 = vadd.s32 %v199, %v200
        %v202 = vrot.slane %v201, 1
        %v203 = vadd.s32 %v201, %v202
        %s204 = vtos %v203
        %v205 = vsel %vm174, -inf, %v131
        %206 = vmax.xlane.f32.xlu0 %v205
        %v207 = vpop.xlane.xlu0 %206
        %v208 = vrot.slane %v207, 4
        %v209 = vmax.f32 %v207, %v208
        %v210 = vrot.slane %v209, 2
        %v211 = vmax.f32 %v209, %v210
        %v212 = vrot.slane %v211, 1
        %v213 = vmax.f32 %v211, %v212
        %s214 = vtos %v213
        %s215 = ssub.s32 256, %s204
        %s216 = scvt.s32.f32 %s215
        %s217 = smul.f32 %s214, %s216
        %s218 = sadd.f32 %s184, %s217
        %v219 = vstv %s218
        %220 = vst [vmem:[%s130] sm:$0x1] %v219
        %s221 = sand.u32 %s52, 1
        %s222 = scalar_lea.sflag [#allocation4], %s221
        %s223 = sand.u32 %s52, 1
        %s224 = scalar_lea.vmem [#allocation5], %s223
        // Predicated region
        $region36: #{tpu_custom_call.1} parent=23 // pred_check
          %p225 = pneg %p62
        $region37: #{tpu_custom_call.1} parent=23 // pred_check_branch
          %227 = sbr.rel (%p225) target = $region39
        $region38: #{tpu_custom_call.1} parent=23 // pred_region
          %s229 = ssub.s32 16, 16
          %230 = vsyncadd %s222, %s229
          %s231 = smul.addr %s18, 16
          %s232 = scalar_lea.hbm %s1, %s231
          %s234 = sshll.u32 %s224, 4
          %s235 = int_to_ptr.vmem [resolvable:$true] %s234
          %237 = dma.vmem_to_hbm [thread:$0]  %s235, 16, %s232, %s222
        $region39: #{tpu_custom_call.1} parent=23 // pred_fallthru
          _
      $region24: #{tpu_custom_call.1} parent=5 // pred_fallthru
        _
      %p238 = scmp.le.s32.totalorder 2, %s13
      // Predicated region
      $region40: #{tpu_custom_call.1} parent=5 // pred_check
        %p239 = pneg %p238
      $region41: #{tpu_custom_call.1} parent=5 // pred_check_branch
        %241 = sbr.rel (%p239) target = $region43
      $region42: #{tpu_custom_call.1} parent=5 // pred_region
        %s242 = ssub.s32 %s13, 2
        // Predicated region
        $region44: #{tpu_custom_call.1} parent=42 // pred_check
          %p243 = pneg %p68
        $region45: #{tpu_custom_call.1} parent=42 // pred_check_branch
          %245 = sbr.rel (%p243) target = $region47
        $region46: #{tpu_custom_call.1} parent=42 // pred_region
          %s246 = sand.u32 %s53, 1
          %s247 = scalar_lea.sflag [#allocation4], %s246
          %s248 = sand.u32 %s53, 1
          %s249 = scalar_lea.vmem [#allocation5], %s248
          %250 = dma.done %s247, 16
        $region47: #{tpu_custom_call.1} parent=42 // pred_fallthru
          _
      $region43: #{tpu_custom_call.1} parent=5 // pred_fallthru
        _
    $region6: #{tpu_custom_call.1} parent=1 // loop_footer
      %s17 = sadd.s32 1, %s13
    $region7: #{tpu_custom_call.1} parent=1 // loop_footer_branch
      %12 = sbr.rel target = $region3
    $region8: #{tpu_custom_call.1} parent=1 // loop_exit
      _
    %251 = vsyncpa [#allocation3], 1
    %s252 = scalar_lea.sflag [#allocation3], 1
    %253 = vsyncpa %s252, 1
    %254 = vsyncpa [#allocation4], 1
    %s255 = scalar_lea.sflag [#allocation4], 1
    %256 = vsyncpa %s255, 1

</llo_original>
